<compile_context>
chip_gen: v6e
topology: v6e:2x2x1
jax: 0.10.0
libtpu: 0.0.40
codegen_flags: <defaults>
</compile_context>

<pallas_src>
import functools
import math

import jax
import jax.numpy as jnp
from jax.experimental import pallas as pl
from jax.experimental.pallas import tpu as pltpu


def _round_up(x, mult):
    return ((x + mult - 1) // mult) * mult


def _choose_q_tile(n):
    n16 = _round_up(max(n, 1), 16)
    t = min(512, n16)
    # v7x has 2 TensorCores; keep >=2 tiles on the "parallel" query axis when possible.
    if t > 16 and n16 <= t:
        t = _round_up((n16 + 1) // 2, 16)
    return t


def _choose_kv_tile(m):
    return min(512, _round_up(max(m, 1), 16))


def _vmem_limit_bytes():
    """~75% of physical VMEM: ~48 MiB on v7x (64 MiB), ~112 MiB on v5e/v6e (128 MiB)."""
    try:
        cap = getattr(pltpu.get_tpu_info(), "vmem_capacity_bytes", None)
        if cap:
            return int(min(cap - (16 << 20), 112 << 20))
    except Exception:
        pass
    return 48 << 20  # conservative fallback, safe on every current generation


# ---------------------------------------------------------------------------
# Projection pass: one lane-dense (rows, D) @ (D, attn) + bias matmul.
# ---------------------------------------------------------------------------
def _linear_kernel(x_ref, w_ref, b_ref, o_ref, *, scale):
    y = jnp.dot(x_ref[...], w_ref[...], preferred_element_type=jnp.float32)
    y = y + b_ref[...]
    if scale != 1.0:
        y = y * scale
    o_ref[...] = y.astype(o_ref.dtype)


def _project(x, w, b, scale, row_tile, vmem_limit):
    rows, d = x.shape
    attn = w.shape[1]
    tr = row_tile
    rows_pad = _round_up(rows, tr)
    x_p = jnp.pad(x, ((0, rows_pad - rows), (0, 0))).astype(jnp.bfloat16)
    w_b = w.astype(jnp.bfloat16)
    b_r = b.astype(jnp.float32).reshape(1, attn)

    kernel = functools.partial(_linear_kernel, scale=scale)
    # Note: weight/bias index maps are constant; a pl.Buffered(1) pipeline_mode
    # would drop their second pipeline buffer (v7x VMEM relief) -- left out to
    # keep lowering maximally portable.
    return pl.pallas_call(
        kernel,
        out_shape=jax.ShapeDtypeStruct((rows_pad, attn), jnp.bfloat16),
        grid_spec=pltpu.PrefetchScalarGridSpec(
            num_scalar_prefetch=0,
            grid=(rows_pad // tr,),
            in_specs=[
                pl.BlockSpec((tr, d), lambda i: (i, 0)),      # input rows tile
                pl.BlockSpec((d, attn), lambda i: (0, 0)),    # weight (VMEM resident)
                pl.BlockSpec((1, attn), lambda i: (0, 0)),    # bias
            ],
            out_specs=pl.BlockSpec((tr, attn), lambda i: (i, 0)),
        ),
        compiler_params=pltpu.CompilerParams(
            dimension_semantics=("parallel",),
            vmem_limit_bytes=vmem_limit,
        ),
    )(x_p, w_b, b_r)


# ---------------------------------------------------------------------------
# Flash-style attention over pre-projected, head-major Q/K/V.
# ---------------------------------------------------------------------------
def _flash_kernel(qh_ref, kh_ref, vh_ref, bias_ref, o_ref,
                  m_ref, l_ref, acc_ref, *, num_heads, head_dim):
    ki = pl.program_id(1)
    H, hd = num_heads, head_dim

    @pl.when(ki == 0)
    def _init():
        m_ref[...] = jnp.full(m_ref.shape, -1e30, jnp.float32)
        l_ref[...] = jnp.zeros(l_ref.shape, jnp.float32)
        acc_ref[...] = jnp.zeros(acc_ref.shape, jnp.float32)

    # Scores for all heads at once (bf16 MXU operands, f32 accumulation).
    s = jnp.einsum('hne,hme->hnm', qh_ref[...], kh_ref[...],
                   preferred_element_type=jnp.float32)            # (H, tq, tk)
    s = s + bias_ref[...]                                         # additive mask (1,1,tk)

    # Flash online softmax across key tiles.
    m_prev = m_ref[...]
    m_new = jnp.maximum(m_prev, jnp.max(s, axis=-1, keepdims=True))
    alpha = jnp.exp(m_prev - m_new)                               # f32, (H, tq, 1)
    # bf16 exp: roughly doubles EUP throughput on v6e/v7x; p is cast to bf16
    # for the PV matmul anyway. (On v5e Mosaic falls back to f32 exp internally.)
    p = jnp.exp((s - m_new).astype(jnp.bfloat16))                 # (H, tq, tk) bf16
    l_ref[...] = alpha * l_ref[...] + jnp.sum(
        p.astype(jnp.float32), axis=-1, keepdims=True)
    acc_ref[...] = alpha * acc_ref[...] + jnp.einsum(
        'hnm,hme->hne', p, vh_ref[...], preferred_element_type=jnp.float32)
    m_ref[...] = m_new

    @pl.when(ki == pl.num_programs(1) - 1)
    def _done():
        inv = pl.reciprocal(jnp.maximum(l_ref[...], 1e-30), approx=True)  # (H, tq, 1)
        out = acc_ref[...] * inv                                          # (H, tq, hd) f32
        # Lane-dense (tq, H*hd) output: place each head at its lane slice once,
        # so the HBM writeback tile is fully dense (no wrapper transpose needed).
        for h in range(H):
            o_ref[:, h * hd:(h + 1) * hd] = out[h].astype(o_ref.dtype)


def multi_head_attention(q, k, v, params, attention_mask=None, *, num_heads):
    """q: (n, Dq), k: (m, Dk), v: (m, Dv). Returns (n, attention_size) float32."""
    wq, bq, wk, bk, wv, bv = params
    n, _ = q.shape
    m, _ = k.shape
    attn = wq.shape[1]
    assert attn % num_heads == 0, "attention_size must be divisible by num_heads"
    assert wv.shape[1] == attn, "module requires output_size == attention_size"
    H = num_heads
    hd = attn // H
    scale = 1.0 / math.sqrt(hd)

    tq = _choose_q_tile(n)
    tk = _choose_kv_tile(m)
    n_pad = _round_up(n, tq)
    m_pad = _round_up(m, tk)
    vmem_limit = _vmem_limit_bytes()

    # 1) Projections once per sequence (lane-dense N=attn matmuls, Pallas).
    qp = _project(q, wq, bq, scale, tq, vmem_limit)   # (n_pad, attn) bf16, scaled
    kp = _project(k, wk, bk, 1.0, tk, vmem_limit)     # (m_pad, attn) bf16
    vp = _project(v, wv, bv, 1.0, tk, vmem_limit)     # (m_pad, attn) bf16

    # 2) Head-major views for the score math (cheap XLA reshape/transpose, once).
    qh = qp.reshape(n_pad, H, hd).transpose(1, 0, 2)  # (H, n_pad, hd)
    kh = kp.reshape(m_pad, H, hd).transpose(1, 0, 2)  # (H, m_pad, hd)
    vh = vp.reshape(m_pad, H, hd).transpose(1, 0, 2)  # (H, m_pad, hd)

    # 3) Additive mask bias: 0 for valid keys, -1e30 for masked / padded keys.
    valid = jnp.arange(m_pad) < m
    if attention_mask is not None:
        am = jnp.pad(attention_mask.astype(jnp.float32).reshape(-1), (0, m_pad - m))
        valid = valid & (am != 0.0)
    bias = jnp.where(valid, 0.0, -1e30).astype(jnp.float32).reshape(1, 1, m_pad)

    grid = (n_pad // tq, m_pad // tk)
    kernel = functools.partial(_flash_kernel, num_heads=H, head_dim=hd)
    out = pl.pallas_call(
        kernel,
        out_shape=jax.ShapeDtypeStruct((n_pad, attn), jnp.float32),
        grid_spec=pltpu.PrefetchScalarGridSpec(
            num_scalar_prefetch=0,
            grid=grid,
            in_specs=[
                pl.BlockSpec((H, tq, hd), lambda i, j: (0, i, 0)),   # projected Q tile
                pl.BlockSpec((H, tk, hd), lambda i, j: (0, j, 0)),   # projected K tile
                pl.BlockSpec((H, tk, hd), lambda i, j: (0, j, 0)),   # projected V tile
                pl.BlockSpec((1, 1, tk), lambda i, j: (0, 0, j)),    # mask-bias tile
            ],
            out_specs=pl.BlockSpec((tq, attn), lambda i, j: (i, 0)), # lane-dense output
            scratch_shapes=[
                pltpu.VMEM((H, tq, 1), jnp.float32),   # running max
                pltpu.VMEM((H, tq, 1), jnp.float32),   # running denominator
                pltpu.VMEM((H, tq, hd), jnp.float32),  # output accumulator
            ],
        ),
        compiler_params=pltpu.CompilerParams(
            dimension_semantics=("parallel", "arbitrary"),
            vmem_limit_bytes=vmem_limit,
        ),
    )(qh, kh, vh, bias)

    return out[:n]


def reference(q, k, v, params, attention_mask, num_heads):
    """Plain-JAX f32 reference mirroring the PyTorch forward."""
    wq, bq, wk, bk, wv, bv = params
    head_dim = wq.shape[1] // num_heads
    query = q @ wq + bq
    key = k @ wk + bk
    value = v @ wv + bv
    n, m = q.shape[0], k.shape[0]
    qh = query.reshape(n, num_heads, head_dim).transpose(1, 0, 2)
    kh = key.reshape(m, num_heads, head_dim).transpose(1, 0, 2)
    vh = value.reshape(m, num_heads, head_dim).transpose(1, 0, 2)
    g = jnp.einsum('hnd,hmd->hnm', qh, kh) / math.sqrt(head_dim)
    if attention_mask is not None:
        g = jnp.where(attention_mask.reshape(1, 1, m) == 0, -jnp.inf, g)
    score = jax.nn.softmax(g, axis=-1)
    o = jnp.einsum('hnm,hmd->hnd', score, vh)
    return o.transpose(1, 0, 2).reshape(n, num_heads * head_dim)


if __name__ == "__main__":
    # Module hyper-params (output_size == attention_size, required by the
    # PyTorch view() of value into (num_heads, head_dim)).
    query_size, key_size, value_size = 16, 16, 16
    attention_size = 32
    output_size = 32
    num_heads = 4
    n, m = 8, 8  # query / key sequence lengths

    key0 = jax.random.PRNGKey(0)
    keys = jax.random.split(key0, 10)

    def linear_init(kw, kb, fan_in, fan_out):
        bound = 1.0 / math.sqrt(fan_in)
        w = jax.random.uniform(kw, (fan_in, fan_out), jnp.float32, -bound, bound)
        b = jax.random.uniform(kb, (fan_out,), jnp.float32, -bound, bound)
        return w, b

    wq, bq = linear_init(keys[0], keys[1], query_size, attention_size)
    wk, bk = linear_init(keys[2], keys[3], key_size, attention_size)
    wv, bv = linear_init(keys[4], keys[5], value_size, output_size)
    params = (wq, bq, wk, bk, wv, bv)

    q = jax.random.normal(keys[6], (n, query_size), jnp.float32)
    k = jax.random.normal(keys[7], (m, key_size), jnp.float32)
    v = jax.random.normal(keys[8], (m, value_size), jnp.float32)

    # attention mask over key positions: mask out the last key
    attention_mask = jnp.ones((m,), jnp.float32).at[-1].set(0.0)

    out = jax.block_until_ready(
        multi_head_attention(q, k, v, params, attention_mask, num_heads=num_heads))
    ref = reference(q, k, v, params, attention_mask, num_heads)
    assert out.shape == (n, attention_size)
    # bf16 MXU operands + bf16 exp -> compare against f32 reference with bf16-level tolerance.
    assert jnp.allclose(out, ref, atol=3e-2, rtol=3e-2), "mismatch vs reference (masked)"

    # also check the no-mask path
    out_nm = jax.block_until_ready(
        multi_head_attention(q, k, v, params, None, num_heads=num_heads))
    ref_nm = reference(q, k, v, params, None, num_heads)
    assert jnp.allclose(out_nm, ref_nm, atol=3e-2, rtol=3e-2), "mismatch vs reference (no mask)"

    print("KERNEL_OK")
</pallas_src>

<mosaic_0001>
module attributes {stable_mosaic.version = 11 : i64} {
  func.func @_linear_kernel(%arg0: i32, %arg1: memref<16x16xbf16, #tpu.memory_space<vmem>>, %arg2: memref<16x32xbf16, #tpu.memory_space<vmem>>, %arg3: memref<1x32xf32, #tpu.memory_space<vmem>>, %arg4: memref<16x32xbf16, #tpu.memory_space<vmem>>) attributes {dimension_semantics = [#tpu.dimension_semantics<parallel>], iteration_bounds = array<i64: 1>, scalar_prefetch = 0 : i64, scratch_operands = 0 : i64, tpu.core_type = #tpu.core_type<tc>, window_params = [{transform_indices = @transform_0, window_bounds = array<i64: 16, 16>}, {pipeline_mode = #tpu.pipeline_mode<synchronous>, transform_indices = @transform_1, window_bounds = array<i64: 16, 32>}, {pipeline_mode = #tpu.pipeline_mode<synchronous>, transform_indices = @transform_2, window_bounds = array<i64: 1, 32>}, {transform_indices = @transform_3, window_bounds = array<i64: 16, 32>}]} {
    %c0 = arith.constant 0 : index
    %c0_0 = arith.constant 0 : index
    %0 = vector.load %arg1[%c0, %c0_0] : memref<16x16xbf16, #tpu.memory_space<vmem>>, vector<16x16xbf16>
    %c0_1 = arith.constant 0 : index
    %c0_2 = arith.constant 0 : index
    %1 = vector.load %arg2[%c0_1, %c0_2] : memref<16x32xbf16, #tpu.memory_space<vmem>>, vector<16x32xbf16>
    %cst = arith.constant dense<0.000000e+00> : vector<16x32xf32>
    %2 = tpu.matmul %0, %1, %cst {dimension_numbers = #tpu.dot_dimension_numbers<[1], [0], [0], [1], [0, 0, 1, 1], [], []>} : vector<16x16xbf16>, vector<16x32xbf16>, vector<16x32xf32> -> vector<16x32xf32>
    %c0_3 = arith.constant 0 : index
    %c0_4 = arith.constant 0 : index
    %3 = vector.load %arg3[%c0_3, %c0_4] : memref<1x32xf32, #tpu.memory_space<vmem>>, vector<1x32xf32>
    %4 = vector.broadcast %3 : vector<1x32xf32> to vector<16x32xf32>
    %5 = arith.addf %2, %4 : vector<16x32xf32>
    %cst_5 = arith.constant 0.353553385 : f32
    %6 = vector.broadcast %cst_5 : f32 to vector<16x32xf32>
    %7 = arith.mulf %5, %6 : vector<16x32xf32>
    %8 = arith.truncf %7 : vector<16x32xf32> to vector<16x32xbf16>
    %c0_6 = arith.constant 0 : index
    %c0_7 = arith.constant 0 : index
    %9 = vector.load %arg4[%c0_6, %c0_7] : memref<16x32xbf16, #tpu.memory_space<vmem>>, vector<16x32xbf16>
    tpu.vector_store %arg4[%c0_6, %c0_7], %8 {strides = array<i32>} : memref<16x32xbf16, #tpu.memory_space<vmem>>, vector<16x32xbf16>,
    return
  }
  func.func @transform_0(%arg0: i32) -> (i32, i32) {
    %c0_i32 = arith.constant 0 : i32
    %c0_i32_0 = arith.constant 0 : i32
    return %arg0, %c0_i32 : i32, i32
  }
  func.func @transform_1(%arg0: i32) -> (i32, i32) {
    %c0_i32 = arith.constant 0 : i32
    %c0_i32_0 = arith.constant 0 : i32
    %c0_i32_1 = arith.constant 0 : i32
    return %c0_i32, %c0_i32_0 : i32, i32
  }
  func.func @transform_2(%arg0: i32) -> (i32, i32) {
    %c0_i32 = arith.constant 0 : i32
    %c0_i32_0 = arith.constant 0 : i32
    %c0_i32_1 = arith.constant 0 : i32
    return %c0_i32, %c0_i32_0 : i32, i32
  }
  func.func @transform_3(%arg0: i32) -> (i32, i32) {
    %c0_i32 = arith.constant 0 : i32
    %c0_i32_0 = arith.constant 0 : i32
    return %arg0, %c0_i32 : i32, i32
  }
}

</mosaic_0001>

<llo_original>
// kernel: tpu_custom_call.1
$region0: #{tpu_custom_call.1}
  #allocation0 [shape = 'u32[]', space=smem, size = 0x4, offset = 0x4, fixed_abs, tag = 'smem constant byte address 0x4 - core index']
  #allocation1 [shape = 'u32[144,128]{1,0:T(1,128)}', space=vmem, size = 0x12000, scoped, tag = 'internal scratch']
  %s0 = inlined_call_operand.hbm [shape: bf16[16,16], index: 0, kind: input, shape index: {}]
  %s1 = inlined_call_operand.hbm [shape: bf16[16,32], index: 1, kind: input, shape index: {}]
  %s2 = inlined_call_operand.vmem [shape: f32[1,32], index: 2, kind: input, shape index: {}]
  %s3 = inlined_call_operand.hbm [shape: bf16[16,32], index: 3, kind: output, shape index: {}]
  %s4 = sld [smem:[#allocation0]]
  $region30: #{tpu_custom_call.1} parent=0
    _
  %s6 = ssub.s32 1, %s4
  %s7 = scalar_select 0, %s6, %s4
  $region1: #{tpu_custom_call.1} parent=0
    #allocation2 [shape = 'u8[4096]{0}', space=vmem, size = 0x1000, scoped, tag = 'input window, operand 0, single buffered']
    #allocation3 [shape = 's32[1]{0}', space=sflag, size = 0x4, scoped, tag = 'scoped memory for tpu_custom_call.1']
    #allocation4 [shape = 's32[1]{0}', space=sflag, size = 0x4, scoped, tag = 'scoped memory for tpu_custom_call.1']
    #allocation5 [shape = 'u8[4096]{0}', space=vmem, size = 0x1000, scoped, tag = 'input window, operand 1, single buffered']
    #allocation6 [shape = 's32[1]{0}', space=sflag, size = 0x4, scoped, tag = 'scoped memory for tpu_custom_call.1']
    #allocation7 [shape = 'u8[4096]{0}', space=vmem, size = 0x1000, scoped, tag = 'output window, operand 0, single buffered']
    %8 = vsyncpa [#allocation3], 0
    %9 = vsyncpa [#allocation6], 0
    %10 = vsyncpa [#allocation4], 0
    // Predicated region
    $region2: #{tpu_custom_call.1} parent=1 // pred_check
      _
    $region3: #{tpu_custom_call.1} parent=1 // pred_check_branch
      %12 = sbr.rel (0) target = $region5
    $region4: #{tpu_custom_call.1} parent=1 // pred_region
      %s14 = ssub.s32 128, 128
      %15 = vsyncadd [#allocation3], %s14
      %s16 = sshll.u32 [#allocation2], 4
      %s17 = int_to_ptr.vmem [resolvable:$true] %s16
      %22 = dma.hbm_to_vmem [thread:$0]  %s0, 128, %s17, [#allocation3], 64, 64, 4
    $region5: #{tpu_custom_call.1} parent=1 // pred_fallthru
      _
    // Predicated region
    $region6: #{tpu_custom_call.1} parent=1 // pred_check
      _
    $region7: #{tpu_custom_call.1} parent=1 // pred_check_branch
      %24 = sbr.rel (0) target = $region9
    $region8: #{tpu_custom_call.1} parent=1 // pred_region
      %s26 = ssub.s32 128, 128
      %27 = vsyncadd [#allocation6], %s26
      %s28 = sshll.u32 [#allocation5], 4
      %s29 = int_to_ptr.vmem [resolvable:$true] %s28
      %34 = dma.hbm_to_vmem [thread:$0]  %s1, 128, %s29, [#allocation6], 64, 64, 4
    $region9: #{tpu_custom_call.1} parent=1 // pred_fallthru
      _
    // Predicated region
    $region10: #{tpu_custom_call.1} parent=1 // pred_check
      _
    $region11: #{tpu_custom_call.1} parent=1 // pred_check_branch
      %36 = sbr.rel (0) target = $region13
    $region12: #{tpu_custom_call.1} parent=1 // pred_region
      _
    $region13: #{tpu_custom_call.1} parent=1 // pred_fallthru
      _
    // Predicated region
    $region14: #{tpu_custom_call.1} parent=1 // pred_check
      _
    $region15: #{tpu_custom_call.1} parent=1 // pred_check_branch
      %38 = sbr.rel (0) target = $region17
    $region16: #{tpu_custom_call.1} parent=1 // pred_region
      %39 = dma.done [#allocation3], 128
    $region17: #{tpu_custom_call.1} parent=1 // pred_fallthru
      _
    // Predicated region
    $region18: #{tpu_custom_call.1} parent=1 // pred_check
      _
    $region19: #{tpu_custom_call.1} parent=1 // pred_check_branch
      %41 = sbr.rel (0) target = $region21
    $region20: #{tpu_custom_call.1} parent=1 // pred_region
      %42 = dma.done [#allocation6], 128
    $region21: #{tpu_custom_call.1} parent=1 // pred_fallthru
      _
    %v44 = vld [vmem:[#allocation2] sm:$0xf]
    %v45 = vld [vmem:[#allocation2 + $0x4] sm:$0xf]
    %v46 = vld [vmem:[#allocation5] sm:$0xf]
    %v47 = vld [vmem:[#allocation5 + $0x4] sm:$0xf]
    %v48 = vld [vmem:[%s2] sm:$0x1]
    %v50 = vlaneseq
    %v51 = vshrl.u32 %v50, 7
    %v52 = vsub.s32 0, %v51
    %v53 = vrot.slane %v48, %v52
    %v57 = vunpack.c.l.b16 %v44
    %v58 = vunpack.c.l.b16 %v45
    %v59 = vpack.c.b16 %v58, %v57
    %v62 = vunpack.c.l.b16 %v46
    %v63 = vunpack.c.l.b16 %v47
    %v64 = vpack.c.b16 %v63, %v62
    %vm66 = vcmask 130048
    %v68 = vsel %vm66, %v59, 0
    %70 = vmatprep.subr.bf16.mxu0 0
    %71 = vmatpush1.bf16.msra.mxu0 0
    %72 = vmatprep.subr.bf16.mxu0 0
    %73 = vmatpush1.bf16.msra.mxu0 0
    %74 = vmatprep.subr.bf16.mxu0 0
    %75 = vmatpush1.bf16.msra.mxu0 0
    %76 = vmatprep.subr.bf16.mxu0 0
    %77 = vmatpush1.bf16.msra.mxu0 0
    %78 = vmatprep.subr.bf16.mxu0 0
    %79 = vmatpush1.bf16.msra.mxu0 0
    %80 = vmatprep.subr.bf16.mxu0 0
    %81 = vmatpush1.bf16.msra.mxu0 0
    %82 = vmatprep.subr.bf16.mxu0 0
    %83 = vmatpush1.bf16.msra.mxu0 0
    %84 = vmatprep.subr.bf16.mxu0 0
    %85 = vmatpush1.bf16.msra.mxu0 %v64
    %86 = vmatprep.subr.bf16.mxu0 0
    %87 = vmatpush2.bf16.msra.mxu0 0
    %88 = vmatprep.subr.bf16.mxu0 0
    %89 = vmatpush2.bf16.msra.mxu0 0
    %90 = vmatprep.subr.bf16.mxu0 0
    %91 = vmatpush2.bf16.msra.mxu0 0
    %92 = vmatprep.subr.bf16.mxu0 0
    %93 = vmatpush2.bf16.msra.mxu0 0
    %94 = vmatprep.subr.bf16.mxu0 0
    %95 = vmatpush2.bf16.msra.mxu0 0
    %96 = vmatprep.subr.bf16.mxu0 0
    %97 = vmatpush2.bf16.msra.mxu0 0
    %98 = vmatprep.subr.bf16.mxu0 0
    %99 = vmatpush2.bf16.msra.mxu0 0
    %100 = vmatprep.subr.bf16.mxu0 0
    %101 = vmatpush2.bf16.msra.mxu0 0
    %102 = vmatprep.mubr.bf16.mxu0 0
    %103 = vmatmul.mubr.bf16.gmra.mxu0 %v68
    %v104 = vpop.f32.mrf.mxu0
    %v105 = vadd.f32 %v53, %v104
    %v106 = vpop.f32.mrf.mxu0
    %v107 = vpop.f32.mrf.mxu0
    %v108 = vadd.f32 %v53, %v107
    %v109 = vpop.f32.mrf.mxu0
    %110 = vdwg.mxu0
    %v111 = vmul.f32 %v105, 0.35355338
    %v112 = vmul.f32 %v108, 0.35355338
    %v113 = vpack.c.bf16 %v112, %v111
    %v115 = vunpack.c.l.b16 %v113
    %v116 = vunpack.c.h.b16 %v113
    %v117 = vpack.c.b16 %v115, %v115
    %v118 = vpack.c.b16 %v116, %v116
    %vm121 = vcmask 257024
    %122 = vst.msk [vmem:[#allocation7] sm:$0xf] %vm121, %v117
    %123 = vst.msk [vmem:[#allocation7 + $0x4] sm:$0xf] %vm121, %v118
    // Predicated region
    $region22: #{tpu_custom_call.1} parent=1 // pred_check
      _
    $region23: #{tpu_custom_call.1} parent=1 // pred_check_branch
      %125 = sbr.rel (0) target = $region25
    $region24: #{tpu_custom_call.1} parent=1 // pred_region
      %s127 = ssub.s32 128, 128
      %128 = vsyncadd [#allocation4], %s127
      %s129 = sshll.u32 [#allocation7], 4
      %s130 = int_to_ptr.vmem [resolvable:$true] %s129
      %135 = dma.vmem_to_hbm [thread:$0]  %s130, 128, %s3, [#allocation4], 64, 64, 4
    $region25: #{tpu_custom_call.1} parent=1 // pred_fallthru
      _
    // Predicated region
    $region26: #{tpu_custom_call.1} parent=1 // pred_check
      _
    $region27: #{tpu_custom_call.1} parent=1 // pred_check_branch
      %137 = sbr.rel (0) target = $region29
    $region28: #{tpu_custom_call.1} parent=1 // pred_region
      %138 = dma.done [#allocation4], 128
    $region29: #{tpu_custom_call.1} parent=1 // pred_fallthru
      _
    %139 = vsyncpa [#allocation3], 1
    %140 = vsyncpa [#allocation6], 1
    %141 = vsyncpa [#allocation4], 1

</llo_original>
